<compile_context>
chip_gen: v7x
topology: tpu7x:2x2x1
jax: 0.10.0
libtpu: 0.0.40
codegen_flags: <defaults>
</compile_context>

<pallas_src>
import functools

import jax
import jax.numpy as jnp
from jax.experimental import pallas as pl
from jax.experimental.pallas import tpu as pltpu


# ------------------------------ tile sizing --------------------------------- #

def _pick_row_tile(N, D, budget_bytes=4 << 20, cap=2048):
    """Largest multiple-of-8 row tile whose f32 block fits a ~4 MiB budget.

    Conservative so double-buffered in+out blocks stay well under the default
    scoped-VMEM limit on every generation (16 MiB v5e, 32 MiB v6e/v7x).
    """
    t = budget_bytes // max(1, D * 4)
    t = min(t, cap)
    t = (t // 8) * 8
    if t <= 0:
        t = 8
    if t >= N:
        return N          # full-extent block is always layout-legal
    return t


def _pick_feature_tile(N, D, budget_bytes=4 << 20, cap=1024):
    """Largest multiple-of-128 feature tile whose (N, TILE_D) f32 block fits."""
    if D <= 128:
        return D          # full-extent block is always layout-legal
    t = budget_bytes // max(1, N * 4)
    t = min(t, cap)
    t = (t // 128) * 128
    if t <= 0:
        t = 128
    if t >= D:
        return D
    return t


# ------------------------------- kernels ------------------------------------ #

def _layernorm_kernel(x_ref, w_ref, b_ref, o_ref, *, eps):
    x = x_ref[...].astype(jnp.float32)
    mu = jnp.mean(x, axis=-1, keepdims=True)
    xc = x - mu
    var = jnp.mean(xc * xc, axis=-1, keepdims=True)           # biased, like torch
    inv = jax.lax.rsqrt(var + eps)
    y = xc * inv * w_ref[...].astype(jnp.float32) + b_ref[...].astype(jnp.float32)
    o_ref[...] = y.astype(o_ref.dtype)


def _batchnorm_kernel(x_ref, w_ref, b_ref, o_ref, *, eps):
    # nn.BatchNorm1d training-mode forward: stats over the batch (row) axis.
    # The block holds ALL rows for a slice of features, so the reduction is exact.
    # TODO(synk): running-mean/var buffer updates (eval mode) are stateful and
    # not modeled here; only the training-mode forward output is reproduced.
    x = x_ref[...].astype(jnp.float32)
    mu = jnp.mean(x, axis=0, keepdims=True)
    xc = x - mu
    var = jnp.mean(xc * xc, axis=0, keepdims=True)             # biased, like torch BN
    inv = jax.lax.rsqrt(var + eps)
    y = xc * inv * w_ref[...].astype(jnp.float32) + b_ref[...].astype(jnp.float32)
    o_ref[...] = y.astype(o_ref.dtype)


def _instancenorm_kernel(x_ref, seg_ref, o_ref, *, eps, num_graphs):
    # Graph InstanceNorm: per-graph mean over nodes, per-graph mean sq-dev,
    # out = (x - mu) * rsqrt(var + eps), broadcast back to nodes via the
    # one-hot assignment matrix on the MXU.  The one-hot is built in-kernel
    # from int32 segment ids (no f32 (N, G) HBM traffic).
    x = x_ref[...].astype(jnp.float32)                         # (N, D)
    n = x.shape[0]
    seg_ids = seg_ref[...]                                     # (N, 1) int32
    g_iota = jax.lax.broadcasted_iota(jnp.int32, (n, num_graphs), 1)
    seg = (seg_ids == g_iota).astype(jnp.float32)              # (N, G) one-hot

    counts = jnp.sum(seg, axis=0)[:, None]                     # (G, 1)
    counts = jnp.maximum(counts, 1.0)                          # guard empty graphs

    mu_g = jnp.einsum("ng,nd->gd", seg, x,
                      preferred_element_type=jnp.float32) / counts      # (G, D)
    mu = jnp.einsum("ng,gd->nd", seg, mu_g,
                    preferred_element_type=jnp.float32)                 # (N, D)
    xc = x - mu                                                          # reused
    var_g = jnp.einsum("ng,nd->gd", seg, xc * xc,
                       preferred_element_type=jnp.float32) / counts     # (G, D)
    inv_std_g = jax.lax.rsqrt(var_g + eps)                               # (G, D)
    inv_std = jnp.einsum("ng,gd->nd", seg, inv_std_g,
                         preferred_element_type=jnp.float32)            # (N, D)
    o_ref[...] = (xc * inv_std).astype(o_ref.dtype)


# ------------------------------- wrappers ------------------------------------ #

def layernorm(x, weight, bias, eps=1e-5):
    N, D = x.shape
    tile_n = _pick_row_tile(N, D)
    grid = (pl.cdiv(N, tile_n),)
    return pl.pallas_call(
        functools.partial(_layernorm_kernel, eps=eps),
        out_shape=jax.ShapeDtypeStruct((N, D), x.dtype),
        grid=grid,
        in_specs=[
            pl.BlockSpec((tile_n, D), lambda i: (i, 0)),
            pl.BlockSpec((1, D), lambda i: (0, 0)),       # resident params
            pl.BlockSpec((1, D), lambda i: (0, 0)),
        ],
        out_specs=pl.BlockSpec((tile_n, D), lambda i: (i, 0)),
        compiler_params=pltpu.CompilerParams(
            dimension_semantics=("parallel",)),
    )(x, weight, bias)


def batchnorm(x, weight, bias, eps=1e-5):
    # TODO(synk): for N so large that an (N, TILE_D) block cannot fit VMEM, a
    # two-pass row-tiled accumulation (sum / sumsq scratch) would be needed.
    N, D = x.shape
    tile_d = _pick_feature_tile(N, D)
    grid = (pl.cdiv(D, tile_d),)
    return pl.pallas_call(
        functools.partial(_batchnorm_kernel, eps=eps),
        out_shape=jax.ShapeDtypeStruct((N, D), x.dtype),
        grid=grid,
        in_specs=[
            pl.BlockSpec((N, tile_d), lambda j: (0, j)),
            pl.BlockSpec((1, tile_d), lambda j: (0, j)),
            pl.BlockSpec((1, tile_d), lambda j: (0, j)),
        ],
        out_specs=pl.BlockSpec((N, tile_d), lambda j: (0, j)),
        compiler_params=pltpu.CompilerParams(
            dimension_semantics=("parallel",)),
    )(x, weight, bias)


def instancenorm(x, segment_ids, num_graphs, eps=1e-6):
    # TODO(synk): two-sweep row-tiled variant (per-graph sum/sumsq scratch) for
    # node counts that exceed a single VMEM-resident block.
    N, D = x.shape
    seg = segment_ids.astype(jnp.int32).reshape(N, 1)
    return pl.pallas_call(
        functools.partial(_instancenorm_kernel, eps=eps, num_graphs=num_graphs),
        out_shape=jax.ShapeDtypeStruct((N, D), x.dtype),
        grid=(1,),
        in_specs=[
            pl.BlockSpec((N, D), lambda i: (0, 0)),
            pl.BlockSpec((N, 1), lambda i: (0, 0)),
        ],
        out_specs=pl.BlockSpec((N, D), lambda i: (0, 0)),
        compiler_params=pltpu.CompilerParams(
            dimension_semantics=("arbitrary",)),
    )(x, seg)


class Norm:
    """JAX/Pallas port of nfflr.nn.Norm."""

    def __init__(self, num_features, norm_type="layernorm", mode="node"):
        assert norm_type in ("batchnorm", "layernorm", "instancenorm")
        assert mode in ("node", "edge")
        self.norm_type = norm_type
        self.mode = mode  # 'node' vs 'edge' only selects which graph data x is;
                          # with an explicit (x, segment_ids) interface they coincide.
        # Deterministic parameter init: PyTorch defaults weight=1, bias=0.
        self.weight = jnp.ones((1, num_features), jnp.float32)
        self.bias = jnp.zeros((1, num_features), jnp.float32)

    def __call__(self, x, segment_ids=None, num_graphs=None):
        if self.norm_type == "layernorm":
            return layernorm(x, self.weight, self.bias, eps=1e-5)
        elif self.norm_type == "batchnorm":
            return batchnorm(x, self.weight, self.bias, eps=1e-5)
        else:  # instancenorm
            assert segment_ids is not None and num_graphs is not None
            return instancenorm(x, segment_ids, num_graphs, eps=1e-6)


# --------------------------- reference (plain JAX) --------------------------- #

def _layernorm_ref(x, w, b, eps=1e-5):
    mu = jnp.mean(x, -1, keepdims=True)
    var = jnp.mean((x - mu) ** 2, -1, keepdims=True)
    return (x - mu) * jax.lax.rsqrt(var + eps) * w + b


def _batchnorm_ref(x, w, b, eps=1e-5):
    mu = jnp.mean(x, 0, keepdims=True)
    var = jnp.mean((x - mu) ** 2, 0, keepdims=True)
    return (x - mu) * jax.lax.rsqrt(var + eps) * w + b


def _instancenorm_ref(x, seg_ids, num_graphs, eps=1e-6):
    seg = jax.nn.one_hot(seg_ids, num_graphs, dtype=jnp.float32)
    cnt = jnp.sum(seg, 0)[:, None]
    mu_g = seg.T @ x / cnt
    mu = seg @ mu_g
    var_g = seg.T @ ((x - mu) ** 2) / cnt
    std = seg @ jnp.sqrt(var_g + eps)
    return (x - mu) / std


# ----------------------------------- main ------------------------------------ #

if __name__ == "__main__":
    key = jax.random.PRNGKey(0)
    N, D = 8, 32
    x = jax.random.normal(key, (N, D), dtype=jnp.float32)

    # layernorm (module default)
    ln = Norm(D, norm_type="layernorm")
    y_ln = ln(x)

    # batchnorm
    bn = Norm(D, norm_type="batchnorm")
    y_bn = bn(x)

    # instancenorm over a batched "graph": 2 graphs x 4 nodes each
    segment_ids = jnp.array([0, 0, 0, 0, 1, 1, 1, 1], dtype=jnp.int32)
    inorm = Norm(D, norm_type="instancenorm", mode="node")
    y_in = inorm(x, segment_ids=segment_ids, num_graphs=2)

    jax.block_until_ready((y_ln, y_bn, y_in))

    # correctness vs plain-JAX references
    assert jnp.allclose(y_ln, _layernorm_ref(x, ln.weight, ln.bias), atol=1e-5)
    assert jnp.allclose(y_bn, _batchnorm_ref(x, bn.weight, bn.bias), atol=1e-5)
    assert jnp.allclose(y_in, _instancenorm_ref(x, segment_ids, 2), atol=1e-5)

    print("KERNEL_OK")
</pallas_src>

<mosaic_0001>
module attributes {stable_mosaic.version = 11 : i64} {
  func.func @_layernorm_kernel(%arg0: i32, %arg1: memref<8x32xf32, #tpu.memory_space<vmem>>, %arg2: memref<1x32xf32, #tpu.memory_space<vmem>>, %arg3: memref<1x32xf32, #tpu.memory_space<vmem>>, %arg4: memref<8x32xf32, #tpu.memory_space<vmem>>) attributes {dimension_semantics = [#tpu.dimension_semantics<parallel>], iteration_bounds = array<i64: 1>, scalar_prefetch = 0 : i64, scratch_operands = 0 : i64, tpu.core_type = #tpu.core_type<tc>, window_params = [{transform_indices = @transform_0, window_bounds = array<i64: 8, 32>}, {pipeline_mode = #tpu.pipeline_mode<synchronous>, transform_indices = @transform_1, window_bounds = array<i64: 1, 32>}, {pipeline_mode = #tpu.pipeline_mode<synchronous>, transform_indices = @transform_2, window_bounds = array<i64: 1, 32>}, {transform_indices = @transform_3, window_bounds = array<i64: 8, 32>}]} {
    %c0 = arith.constant 0 : index
    %c0_0 = arith.constant 0 : index
    %0 = vector.load %arg1[%c0, %c0_0] : memref<8x32xf32, #tpu.memory_space<vmem>>, vector<8x32xf32>
    %cst = arith.constant dense<0.000000e+00> : vector<8xf32>
    %1 = vector.multi_reduction <add>, %0, %cst [1] : vector<8x32xf32> to vector<8xf32>
    %2 = vector.shape_cast %1 : vector<8xf32> to vector<8x1xf32>
    %cst_1 = arith.constant 3.200000e+01 : f32
    %3 = vector.broadcast %cst_1 : f32 to vector<8x1xf32>
    %4 = arith.divf %2, %3 : vector<8x1xf32>
    %5 = vector.broadcast %4 : vector<8x1xf32> to vector<8x32xf32>
    %6 = arith.subf %0, %5 : vector<8x32xf32>
    %7 = arith.mulf %6, %6 : vector<8x32xf32>
    %cst_2 = arith.constant dense<0.000000e+00> : vector<8xf32>
    %8 = vector.multi_reduction <add>, %7, %cst_2 [1] : vector<8x32xf32> to vector<8xf32>
    %9 = vector.shape_cast %8 : vector<8xf32> to vector<8x1xf32>
    %cst_3 = arith.constant 3.200000e+01 : f32
    %10 = vector.broadcast %cst_3 : f32 to vector<8x1xf32>
    %11 = arith.divf %9, %10 : vector<8x1xf32>
    %cst_4 = arith.constant 9.99999974E-6 : f32
    %12 = vector.broadcast %cst_4 : f32 to vector<8x1xf32>
    %13 = arith.addf %11, %12 : vector<8x1xf32>
    %14 = math.rsqrt %13 : vector<8x1xf32>
    %15 = vector.broadcast %14 : vector<8x1xf32> to vector<8x32xf32>
    %16 = arith.mulf %6, %15 : vector<8x32xf32>
    %c0_5 = arith.constant 0 : index
    %c0_6 = arith.constant 0 : index
    %17 = vector.load %arg2[%c0_5, %c0_6] : memref<1x32xf32, #tpu.memory_space<vmem>>, vector<1x32xf32>
    %18 = vector.broadcast %17 : vector<1x32xf32> to vector<8x32xf32>
    %19 = arith.mulf %16, %18 : vector<8x32xf32>
    %c0_7 = arith.constant 0 : index
    %c0_8 = arith.constant 0 : index
    %20 = vector.load %arg3[%c0_7, %c0_8] : memref<1x32xf32, #tpu.memory_space<vmem>>, vector<1x32xf32>
    %21 = vector.broadcast %20 : vector<1x32xf32> to vector<8x32xf32>
    %22 = arith.addf %19, %21 : vector<8x32xf32>
    %c0_9 = arith.constant 0 : index
    %c0_10 = arith.constant 0 : index
    %23 = vector.load %arg4[%c0_9, %c0_10] : memref<8x32xf32, #tpu.memory_space<vmem>>, vector<8x32xf32>
    tpu.vector_store %arg4[%c0_9, %c0_10], %22 {strides = array<i32>} : memref<8x32xf32, #tpu.memory_space<vmem>>, vector<8x32xf32>,
    return
  }
  func.func @transform_0(%arg0: i32) -> (i32, i32) {
    %c0_i32 = arith.constant 0 : i32
    %c0_i32_0 = arith.constant 0 : i32
    return %arg0, %c0_i32 : i32, i32
  }
  func.func @transform_1(%arg0: i32) -> (i32, i32) {
    %c0_i32 = arith.constant 0 : i32
    %c0_i32_0 = arith.constant 0 : i32
    %c0_i32_1 = arith.constant 0 : i32
    return %c0_i32, %c0_i32_0 : i32, i32
  }
  func.func @transform_2(%arg0: i32) -> (i32, i32) {
    %c0_i32 = arith.constant 0 : i32
    %c0_i32_0 = arith.constant 0 : i32
    %c0_i32_1 = arith.constant 0 : i32
    return %c0_i32, %c0_i32_0 : i32, i32
  }
  func.func @transform_3(%arg0: i32) -> (i32, i32) {
    %c0_i32 = arith.constant 0 : i32
    %c0_i32_0 = arith.constant 0 : i32
    return %arg0, %c0_i32 : i32, i32
  }
}

</mosaic_0001>

<llo_original>
// kernel: tpu_custom_call.1
$region0: #{tpu_custom_call.1}
  #allocation0 [shape = 'u32[]', space=smem, size = 0x4, offset = 0x4, fixed_abs, tag = 'smem constant byte address 0x4 - core index']
  #allocation1 [shape = 'u32[144,128]{1,0:T(1,128)}', space=vmem, size = 0x12000, scoped, tag = 'internal scratch']
  %s0 = inlined_call_operand.hbm [shape: f32[8,32], index: 0, kind: input, shape index: {}]
  %s1 = inlined_call_operand.vmem [shape: f32[1,32], index: 1, kind: input, shape index: {}]
  %s2 = inlined_call_operand.vmem [shape: f32[1,32], index: 2, kind: input, shape index: {}]
  %s3 = inlined_call_operand.hbm [shape: f32[8,32], index: 3, kind: output, shape index: {}]
  %s4 = sld [smem:[#allocation0]]
  $region26: #{tpu_custom_call.1} parent=0
    _
  %s6 = ssub.s32 1, %s4
  %s7 = scalar_select 0, %s6, %s4
  $region1: #{tpu_custom_call.1} parent=0
    #allocation2 [shape = 'u8[4096]{0}', space=vmem, size = 0x1000, scoped, tag = 'input window, operand 0, single buffered']
    #allocation3 [shape = 's32[1]{0}', space=sflag, size = 0x4, scoped, tag = 'scoped memory for tpu_custom_call.1']
    #allocation4 [shape = 's32[1]{0}', space=sflag, size = 0x4, scoped, tag = 'scoped memory for tpu_custom_call.1']
    #allocation5 [shape = 'u8[4096]{0}', space=vmem, size = 0x1000, scoped, tag = 'output window, operand 0, single buffered']
    %8 = vsyncpa [#allocation3], 0
    %9 = vsyncpa [#allocation4], 0
    // Predicated region
    $region2: #{tpu_custom_call.1} parent=1 // pred_check
      _
    $region3: #{tpu_custom_call.1} parent=1 // pred_check_branch
      %11 = sbr.rel (0) target = $region5
    $region4: #{tpu_custom_call.1} parent=1 // pred_region
      %s13 = ssub.s32 128, 128
      %14 = vsyncadd [#allocation3], %s13
      %s16 = sshll.u32 [#allocation2], 4
      %s17 = int_to_ptr.vmem [resolvable:$true] %s16
      %19 = dma.hbm_to_vmem [thread:$0]  %s0, 128, %s17, [#allocation3]
    $region5: #{tpu_custom_call.1} parent=1 // pred_fallthru
      _
    // Predicated region
    $region6: #{tpu_custom_call.1} parent=1 // pred_check
      _
    $region7: #{tpu_custom_call.1} parent=1 // pred_check_branch
      %21 = sbr.rel (0) target = $region9
    $region8: #{tpu_custom_call.1} parent=1 // pred_region
      _
    $region9: #{tpu_custom_call.1} parent=1 // pred_fallthru
      _
    // Predicated region
    $region10: #{tpu_custom_call.1} parent=1 // pred_check
      _
    $region11: #{tpu_custom_call.1} parent=1 // pred_check_branch
      %23 = sbr.rel (0) target = $region13
    $region12: #{tpu_custom_call.1} parent=1 // pred_region
      _
    $region13: #{tpu_custom_call.1} parent=1 // pred_fallthru
      _
    // Predicated region
    $region14: #{tpu_custom_call.1} parent=1 // pred_check
      _
    $region15: #{tpu_custom_call.1} parent=1 // pred_check_branch
      %25 = sbr.rel (0) target = $region17
    $region16: #{tpu_custom_call.1} parent=1 // pred_region
      %26 = dma.done [#allocation3], 128
    $region17: #{tpu_custom_call.1} parent=1 // pred_fallthru
      _
    %v27 = vld [vmem:[#allocation2] sm:$0xff]
    %vm28 = vcmask 261120
    %v29 = vsel %vm28, %v27, 0.0
    %30 = vadd.xlane.f32.xlu0 %v29
    %v31 = vpop.xlane.xlu0 %30
    %v32 = vrcp.pop 32.0
    %v33 = vmul.f32 %v31, %v32
    %v34 = vsub.f32 %v27, %v33
    %v35 = vmul.f32 %v34, %v34
    %v36 = vsel %vm28, %v35, 0.0
    %37 = vadd.xlane.f32.xlu0 %v36
    %v38 = vpop.xlane.xlu0 %37
    %v39 = vmul.f32 %v38, %v32
    %v40 = vadd.f32 %v39, 1e-05
    %v41 = vrsqrt.pop %v40
    %v42 = vmul.f32 %v34, %v41
    %v43 = vld [vmem:[%s1] sm:$0x1]
    %v45 = vlaneseq
    %v46 = vshrl.u32 %v45, 7
    %v47 = vsub.s32 0, %v46
    %v48 = vrot.slane %v43, %v47
    %v50 = vmul.f32 %v42, %v48
    %v51 = vld [vmem:[%s2] sm:$0x1]
    %v53 = vlaneseq
    %v54 = vshrl.u32 %v53, 7
    %v55 = vsub.s32 0, %v54
    %v56 = vrot.slane %v51, %v55
    %v58 = vadd.f32 %v50, %v56
    %59 = vst.msk [vmem:[#allocation5] sm:$0xff] %vm28, %v58
    // Predicated region
    $region18: #{tpu_custom_call.1} parent=1 // pred_check
      _
    $region19: #{tpu_custom_call.1} parent=1 // pred_check_branch
      %61 = sbr.rel (0) target = $region21
    $region20: #{tpu_custom_call.1} parent=1 // pred_region
      %s63 = ssub.s32 128, 128
      %64 = vsyncadd [#allocation4], %s63
      %s66 = sshll.u32 [#allocation5], 4
      %s67 = int_to_ptr.vmem [resolvable:$true] %s66
      %69 = dma.vmem_to_hbm [thread:$0]  %s67, 128, %s3, [#allocation4]
    $region21: #{tpu_custom_call.1} parent=1 // pred_fallthru
      _
    // Predicated region
    $region22: #{tpu_custom_call.1} parent=1 // pred_check
      _
    $region23: #{tpu_custom_call.1} parent=1 // pred_check_branch
      %71 = sbr.rel (0) target = $region25
    $region24: #{tpu_custom_call.1} parent=1 // pred_region
      %72 = dma.done [#allocation4], 128
    $region25: #{tpu_custom_call.1} parent=1 // pred_fallthru
      _
    %73 = vsyncpa [#allocation3], 1
    %74 = vsyncpa [#allocation4], 1

</llo_original>
